<compile_context>
chip_gen: v7x
topology: tpu7x:2x2x1
jax: 0.10.0
libtpu: 0.0.40
codegen_flags: <defaults>
</compile_context>

<pallas_src>
import functools

import jax
import jax.numpy as jnp
from jax import lax
from jax.experimental import pallas as pl
from jax.experimental.pallas import tpu as pltpu


# ---------------------------------------------------------------------------
# Kernels
# ---------------------------------------------------------------------------

def _partial_sum_kernel(x_ref, y_ref, o_ref, *, block_rows, total_rows,
                        square, mask_tail):
    """Per-block partial sum of (x-y)^2 or |x-y| into an (1,8,128) VMEM block."""
    d = x_ref[...].astype(jnp.float32) - y_ref[...].astype(jnp.float32)
    v = d * d if square else jnp.abs(d)
    if mask_tail:
        # Last block is ragged: rows >= valid contain unspecified data -> zero
        # them with a select (NaN/Inf garbage cannot leak through jnp.where).
        i = pl.program_id(0)
        valid = total_rows - i * block_rows
        rows = lax.broadcasted_iota(jnp.int32, v.shape, 0)
        v = jnp.where(rows < valid, v, jnp.float32(0.0))
    p = jnp.sum(v)                                   # scalar partial for this block
    # Replicate into the tiny (1,8,128) output tile; wrapper reads [:, 0, 0].
    o_ref[...] = jnp.broadcast_to(p, o_ref.shape)


def _cosine_kernel(x_ref, y_ref, o_ref):
    eps = jnp.float32(1e-8)
    x = x_ref[...].astype(jnp.float32)
    y = y_ref[...].astype(jnp.float32)
    dot = jnp.sum(x * y, axis=1, keepdims=True)      # [TB, 1]
    sx = jnp.sum(x * x, axis=1, keepdims=True)       # [TB, 1]
    sy = jnp.sum(y * y, axis=1, keepdims=True)       # [TB, 1]
    # 1/max(||x||, eps) == rsqrt(max(||x||^2, eps^2)) -> EUP, no sqrt + divide
    inv = lax.rsqrt(jnp.maximum(sx, eps * eps)) * lax.rsqrt(
        jnp.maximum(sy, eps * eps))
    o_ref[...] = 1.0 - dot * inv


# ---------------------------------------------------------------------------
# Wrapper (glue stays in plain JAX)
# ---------------------------------------------------------------------------

# Total bytes budgeted for the pipelined inputs: 2 inputs x 2 buffers x block.
_DOUBLE_BUFFER_BUDGET_BYTES = 20 * 1024 * 1024
# Scoped-VMEM ceiling: raises v5e's 16 MiB default, matches v6e/v7x defaults,
# and stays well under v7x's 64 MiB physical VMEM.
_VMEM_LIMIT_BYTES = 32 * 1024 * 1024


def _row_tile(B, D, itemsize, block_rows=None):
    """Pick the row tile: as many rows as fit the double-buffer budget."""
    if block_rows is not None:
        tb = block_rows
    else:
        tb = _DOUBLE_BUFFER_BUDGET_BYTES // (4 * D * itemsize)
    tb = max(8, (tb // 8) * 8)          # sublane-aligned when tiled
    if B <= tb:
        return B                         # full-extent block is always legal
    return tb


def direction_loss(x, y, loss_type="mse", *, block_rows=None):
    """Pallas implementation of DirectionLoss.forward(x, y)."""
    assert x.shape == y.shape and x.ndim == 2, "expected [B, D] inputs"
    B, D = x.shape
    itemsize = jnp.dtype(x.dtype).itemsize

    tb = _row_tile(B, D, itemsize, block_rows)
    grid_b = pl.cdiv(B, tb)
    in_spec = pl.BlockSpec((tb, D), lambda i: (i, 0))
    cparams = pltpu.CompilerParams(
        dimension_semantics=("parallel",),
        vmem_limit_bytes=_VMEM_LIMIT_BYTES)

    if loss_type in ("mse", "mae"):
        kernel = functools.partial(
            _partial_sum_kernel,
            block_rows=tb, total_rows=B,
            square=(loss_type == "mse"),
            mask_tail=(B % tb != 0))
        partials = pl.pallas_call(
            kernel,
            out_shape=jax.ShapeDtypeStruct((grid_b, 8, 128), jnp.float32),
            grid=(grid_b,),
            in_specs=[in_spec, in_spec],
            out_specs=pl.BlockSpec((1, 8, 128), lambda i: (i, 0, 0)),
            compiler_params=cparams,
            cost_estimate=pl.CostEstimate(
                flops=3 * B * D,
                transcendentals=0,
                bytes_accessed=2 * B * D * itemsize + grid_b * 8 * 128 * 4),
        )(x, y)
        # Final tree-style reduction + mean in the wrapper (tiny XLA op).
        return jnp.sum(partials[:, 0, 0]) / jnp.float32(B * D)

    elif loss_type == "cosine":
        out = pl.pallas_call(
            _cosine_kernel,
            out_shape=jax.ShapeDtypeStruct((B, 1), jnp.float32),
            grid=(grid_b,),
            in_specs=[in_spec, in_spec],
            out_specs=pl.BlockSpec((tb, 1), lambda i: (i, 0)),
            compiler_params=cparams,
            cost_estimate=pl.CostEstimate(
                flops=8 * B * D,
                transcendentals=2 * B,
                bytes_accessed=2 * B * D * itemsize + 4 * B),
        )(x, y)
        return out[:, 0]  # [B], like 1 - nn.CosineSimilarity()(x, y)

    else:
        raise ValueError(f"unknown loss_type: {loss_type}")


# ---------------------------------------------------------------------------
# Main
# ---------------------------------------------------------------------------

if __name__ == "__main__":
    key = jax.random.PRNGKey(0)
    kx, ky = jax.random.split(key)

    def _refs(x, y):
        ref_mse = jnp.mean((x - y) ** 2)
        ref_mae = jnp.mean(jnp.abs(x - y))
        nx = jnp.linalg.norm(x, axis=1)
        ny = jnp.linalg.norm(y, axis=1)
        ref_cos = 1.0 - jnp.sum(x * y, axis=1) / (
            jnp.maximum(nx, 1e-8) * jnp.maximum(ny, 1e-8))
        return ref_mse, ref_mae, ref_cos

    # --- small single-block case ------------------------------------------
    B, D = 8, 256
    x = jax.random.normal(kx, (B, D), dtype=jnp.float32)
    y = jax.random.normal(ky, (B, D), dtype=jnp.float32)

    mse = direction_loss(x, y, "mse")
    mae = direction_loss(x, y, "mae")
    cos = direction_loss(x, y, "cosine")
    jax.block_until_ready((mse, mae, cos))

    ref_mse, ref_mae, ref_cos = _refs(x, y)
    assert jnp.allclose(mse, ref_mse, atol=1e-5), (mse, ref_mse)
    assert jnp.allclose(mae, ref_mae, atol=1e-5), (mae, ref_mae)
    assert jnp.allclose(cos, ref_cos, atol=1e-4), (cos, ref_cos)

    # --- native bf16 path (no wrapper up-cast; cast happens in-kernel) -----
    xb = x.astype(jnp.bfloat16)
    yb = y.astype(jnp.bfloat16)
    mse_b = direction_loss(xb, yb, "mse")
    cos_b = direction_loss(xb, yb, "cosine")
    jax.block_until_ready((mse_b, cos_b))
    assert jnp.allclose(mse_b, ref_mse, rtol=5e-2, atol=5e-2), (mse_b, ref_mse)
    assert jnp.allclose(cos_b, ref_cos, rtol=5e-2, atol=5e-2), (cos_b, ref_cos)

    # --- multi-block + ragged tail (exercises in-kernel masking, no padding)
    B2, D2, tb2 = 20, 256, 8          # grid = 3 blocks, last block has 4 valid rows
    x2 = jax.random.normal(kx, (B2, D2), dtype=jnp.float32)
    y2 = jax.random.normal(ky, (B2, D2), dtype=jnp.float32)
    mse2 = direction_loss(x2, y2, "mse", block_rows=tb2)
    mae2 = direction_loss(x2, y2, "mae", block_rows=tb2)
    cos2 = direction_loss(x2, y2, "cosine", block_rows=tb2)
    jax.block_until_ready((mse2, mae2, cos2))
    ref_mse2, ref_mae2, ref_cos2 = _refs(x2, y2)
    assert jnp.allclose(mse2, ref_mse2, atol=1e-5), (mse2, ref_mse2)
    assert jnp.allclose(mae2, ref_mae2, atol=1e-5), (mae2, ref_mae2)
    assert jnp.allclose(cos2, ref_cos2, atol=1e-4), (cos2, ref_cos2)

    print("KERNEL_OK")
</pallas_src>

<mosaic_0001>
module attributes {stable_mosaic.version = 11 : i64} {
  func.func @_partial_sum_kernel(%arg0: i32, %arg1: memref<8x256xf32, #tpu.memory_space<vmem>>, %arg2: memref<8x256xf32, #tpu.memory_space<vmem>>, %arg3: memref<1x8x128xf32, #tpu.memory_space<vmem>>) attributes {dimension_semantics = [#tpu.dimension_semantics<parallel>], iteration_bounds = array<i64: 1>, scalar_prefetch = 0 : i64, scratch_operands = 0 : i64, tpu.core_type = #tpu.core_type<tc>, window_params = [{transform_indices = @transform_0, window_bounds = array<i64: 8, 256>}, {transform_indices = @transform_1, window_bounds = array<i64: 8, 256>}, {transform_indices = @transform_2, window_bounds = array<i64: 1, 8, 128>}]} {
    %c0 = arith.constant 0 : index
    %c0_0 = arith.constant 0 : index
    %0 = vector.load %arg1[%c0, %c0_0] : memref<8x256xf32, #tpu.memory_space<vmem>>, vector<8x256xf32>
    %c0_1 = arith.constant 0 : index
    %c0_2 = arith.constant 0 : index
    %1 = vector.load %arg2[%c0_1, %c0_2] : memref<8x256xf32, #tpu.memory_space<vmem>>, vector<8x256xf32>
    %2 = arith.subf %0, %1 : vector<8x256xf32>
    %3 = arith.mulf %2, %2 : vector<8x256xf32>
    %4 = vector.shape_cast %3 : vector<8x256xf32> to vector<1x8x256xf32>
    %cst = arith.constant dense<0.000000e+00> : vector<1xf32>
    %5 = vector.multi_reduction <add>, %4, %cst [1, 2] : vector<1x8x256xf32> to vector<1xf32>
    %6 = vector.shape_cast %5 : vector<1xf32> to vector<1x1x1xf32>
    %7 = vector.extract %6[0, 0, 0] : f32 from vector<1x1x1xf32>
    %8 = vector.broadcast %7 : f32 to vector<1x8x128xf32>
    %c0_3 = arith.constant 0 : index
    %c0_4 = arith.constant 0 : index
    %c0_5 = arith.constant 0 : index
    %9 = vector.load %arg3[%c0_3, %c0_4, %c0_5] : memref<1x8x128xf32, #tpu.memory_space<vmem>>, vector<1x8x128xf32>
    tpu.vector_store %arg3[%c0_3, %c0_4, %c0_5], %8 {strides = array<i32>} : memref<1x8x128xf32, #tpu.memory_space<vmem>>, vector<1x8x128xf32>,
    return
  }
  func.func @transform_0(%arg0: i32) -> (i32, i32) {
    %c0_i32 = arith.constant 0 : i32
    %c0_i32_0 = arith.constant 0 : i32
    return %arg0, %c0_i32 : i32, i32
  }
  func.func @transform_1(%arg0: i32) -> (i32, i32) {
    %c0_i32 = arith.constant 0 : i32
    %c0_i32_0 = arith.constant 0 : i32
    return %arg0, %c0_i32 : i32, i32
  }
  func.func @transform_2(%arg0: i32) -> (i32, i32, i32) {
    %c0_i32 = arith.constant 0 : i32
    %c0_i32_0 = arith.constant 0 : i32
    %c0_i32_1 = arith.constant 0 : i32
    return %arg0, %c0_i32, %c0_i32_0 : i32, i32, i32
  }
}

</mosaic_0001>

<llo_original>
// kernel: tpu_custom_call.1
$region0: #{tpu_custom_call.1}
  #allocation0 [shape = 'u32[]', space=smem, size = 0x4, offset = 0x4, fixed_abs, tag = 'smem constant byte address 0x4 - core index']
  #allocation1 [shape = 'u32[144,128]{1,0:T(1,128)}', space=vmem, size = 0x12000, scoped, tag = 'internal scratch']
  %s0 = inlined_call_operand.hbm [shape: f32[8,256], index: 0, kind: input, shape index: {}]
  %s1 = inlined_call_operand.hbm [shape: f32[8,256], index: 1, kind: input, shape index: {}]
  %s2 = inlined_call_operand.hbm [shape: f32[1,8,128], index: 2, kind: output, shape index: {}]
  %s3 = sld [smem:[#allocation0]]
  $region26: #{tpu_custom_call.1} parent=0
    _
  %s5 = ssub.s32 1, %s3
  %s6 = scalar_select 0, %s5, %s3
  $region1: #{tpu_custom_call.1} parent=0
    #allocation2 [shape = 'u8[8192]{0}', space=vmem, size = 0x2000, scoped, tag = 'input window, operand 0, single buffered']
    #allocation3 [shape = 's32[1]{0}', space=sflag, size = 0x4, scoped, tag = 'scoped memory for tpu_custom_call.1']
    #allocation4 [shape = 's32[1]{0}', space=sflag, size = 0x4, scoped, tag = 'scoped memory for tpu_custom_call.1']
    #allocation5 [shape = 'u8[8192]{0}', space=vmem, size = 0x2000, scoped, tag = 'input window, operand 1, single buffered']
    #allocation6 [shape = 's32[1]{0}', space=sflag, size = 0x4, scoped, tag = 'scoped memory for tpu_custom_call.1']
    #allocation7 [shape = 'u8[4096]{0}', space=vmem, size = 0x1000, scoped, tag = 'output window, operand 0, single buffered']
    %7 = vsyncpa [#allocation3], 0
    %8 = vsyncpa [#allocation6], 0
    %9 = vsyncpa [#allocation4], 0
    // Predicated region
    $region2: #{tpu_custom_call.1} parent=1 // pred_check
      _
    $region3: #{tpu_custom_call.1} parent=1 // pred_check_branch
      %11 = sbr.rel (0) target = $region5
    $region4: #{tpu_custom_call.1} parent=1 // pred_region
      %s13 = ssub.s32 256, 256
      %14 = vsyncadd [#allocation3], %s13
      %s16 = sshll.u32 [#allocation2], 4
      %s17 = int_to_ptr.vmem [resolvable:$true] %s16
      %19 = dma.hbm_to_vmem [thread:$0]  %s0, 256, %s17, [#allocation3]
    $region5: #{tpu_custom_call.1} parent=1 // pred_fallthru
      _
    // Predicated region
    $region6: #{tpu_custom_call.1} parent=1 // pred_check
      _
    $region7: #{tpu_custom_call.1} parent=1 // pred_check_branch
      %21 = sbr.rel (0) target = $region9
    $region8: #{tpu_custom_call.1} parent=1 // pred_region
      %s23 = ssub.s32 256, 256
      %24 = vsyncadd [#allocation6], %s23
      %s26 = sshll.u32 [#allocation5], 4
      %s27 = int_to_ptr.vmem [resolvable:$true] %s26
      %29 = dma.hbm_to_vmem [thread:$0]  %s1, 256, %s27, [#allocation6]
    $region9: #{tpu_custom_call.1} parent=1 // pred_fallthru
      _
    // Predicated region
    $region10: #{tpu_custom_call.1} parent=1 // pred_check
      _
    $region11: #{tpu_custom_call.1} parent=1 // pred_check_branch
      %31 = sbr.rel (0) target = $region13
    $region12: #{tpu_custom_call.1} parent=1 // pred_region
      %32 = dma.done [#allocation3], 256
    $region13: #{tpu_custom_call.1} parent=1 // pred_fallthru
      _
    // Predicated region
    $region14: #{tpu_custom_call.1} parent=1 // pred_check
      _
    $region15: #{tpu_custom_call.1} parent=1 // pred_check_branch
      %34 = sbr.rel (0) target = $region17
    $region16: #{tpu_custom_call.1} parent=1 // pred_region
      %35 = dma.done [#allocation6], 256
    $region17: #{tpu_custom_call.1} parent=1 // pred_fallthru
      _
    %v36 = vld [vmem:[#allocation2] sm:$0xff]
    %v37 = vld [vmem:[#allocation2 + $0x8] sm:$0xff]
    %v38 = vld [vmem:[#allocation5] sm:$0xff]
    %v39 = vld [vmem:[#allocation5 + $0x8] sm:$0xff]
    %v40 = vsub.f32 %v36, %v38
    %v41 = vsub.f32 %v37, %v39
    %v42 = vmul.f32 %v40, %v40
    %v43 = vmul.f32 %v41, %v41
    %v44 = vadd.f32 %v42, %v43
    %45 = vadd.xlane.f32.xlu0 %v44
    %v46 = vpop.xlane.xlu0 %45
    %v47 = vrot.slane %v46, 4
    %v48 = vadd.f32 %v46, %v47
    %v49 = vrot.slane %v48, 2
    %v50 = vadd.f32 %v48, %v49
    %v51 = vrot.slane %v50, 1
    %v52 = vadd.f32 %v50, %v51
    %s53 = vtos %v52
    %v54 = vstv %s53
    %55 = vst [vmem:[#allocation7] sm:$0xff] %v54
    // Predicated region
    $region18: #{tpu_custom_call.1} parent=1 // pred_check
      _
    $region19: #{tpu_custom_call.1} parent=1 // pred_check_branch
      %57 = sbr.rel (0) target = $region21
    $region20: #{tpu_custom_call.1} parent=1 // pred_region
      %s59 = ssub.s32 128, 128
      %60 = vsyncadd [#allocation4], %s59
      %s62 = sshll.u32 [#allocation7], 4
      %s63 = int_to_ptr.vmem [resolvable:$true] %s62
      %65 = dma.vmem_to_hbm [thread:$0]  %s63, 128, %s2, [#allocation4]
    $region21: #{tpu_custom_call.1} parent=1 // pred_fallthru
      _
    // Predicated region
    $region22: #{tpu_custom_call.1} parent=1 // pred_check
      _
    $region23: #{tpu_custom_call.1} parent=1 // pred_check_branch
      %67 = sbr.rel (0) target = $region25
    $region24: #{tpu_custom_call.1} parent=1 // pred_region
      %68 = dma.done [#allocation4], 128
    $region25: #{tpu_custom_call.1} parent=1 // pred_fallthru
      _
    %69 = vsyncpa [#allocation3], 1
    %70 = vsyncpa [#allocation6], 1
    %71 = vsyncpa [#allocation4], 1

</llo_original>
